<compile_context>
chip_gen: v7x
topology: tpu7x:2x2x1
jax: 0.10.0
libtpu: 0.0.40
codegen_flags: <defaults>
</compile_context>

<pallas_src>
import jax
import jax.numpy as jnp
from jax.experimental import pallas as pl
from jax.experimental.pallas import tpu as pltpu


def _bn_pair_kernel(x_ref, z_ref, sx_ref, bx_ref, sz_ref, bz_ref,
                    ox_ref, oz_ref):
    # x_ref : (RB, Hx*Wx)   sx_ref / bx_ref : (RB, 1)  -> broadcast along lanes
    # z_ref : (RB, Hz*Wz)   sz_ref / bz_ref : (RB, 1)
    x = x_ref[...].astype(jnp.float32)
    z = z_ref[...].astype(jnp.float32)
    ox_ref[...] = (x * sx_ref[...] + bx_ref[...]).astype(ox_ref.dtype)
    oz_ref[...] = (z * sz_ref[...] + bz_ref[...]).astype(oz_ref.dtype)


def _fold_bn(p, eps):
    """Fold eval-mode BatchNorm into per-channel (scale, shift), f32."""
    scale = p['gamma'].astype(jnp.float32) * jax.lax.rsqrt(
        p['var'].astype(jnp.float32) + eps)
    shift = p['beta'].astype(jnp.float32) - p['mean'].astype(jnp.float32) * scale
    return scale, shift


def _round_up(n, m):
    return ((n + m - 1) // m) * m


def _pick_row_block(rows8, lane_x, lane_z, itemsize):
    """Row-block (multiple of 8) for the (B*C, H*W) view.

    Targets ~512 KiB of in+out data per step (double-buffered footprint stays
    far below v5e's 16 MiB scoped-VMEM default and v7x's 64 MiB physical VMEM)
    and prefers >=2 grid steps so the "parallel" axis can shard across v7x's
    two TensorCores.
    """
    target_bytes = 512 * 1024
    per_row_bytes = 2 * (lane_x + lane_z) * itemsize          # input + output
    rb = max(8, (target_bytes // max(per_row_bytes, 1)) // 8 * 8)
    half = max(8, (rows8 // 2) // 8 * 8)                      # aim for >=2 steps
    return int(min(rb, half, rows8))


def bn_adj_forward(xf, zf, params, *, eps=1e-5):
    """xf: (B, C, Hx, Wx), zf: (B, C, Hz, Wz), NCHW. Returns (BN_x(xf), BN_z(zf))."""
    B, C, Hx, Wx = xf.shape
    Bz, Cz, Hz, Wz = zf.shape
    assert B == Bz and C == Cz, "xf and zf must share batch and channel dims"
    Lx = Hx * Wx
    Lz = Hz * Wz
    R = B * C                                   # rows of the (B*C, H*W) view

    scale_x, shift_x = _fold_bn(params['x'], eps)   # (C,)
    scale_z, shift_z = _fold_bn(params['z'], eps)

    rows8 = _round_up(R, 8)
    rb = _pick_row_block(rows8, Lx, Lz, jnp.dtype(xf.dtype).itemsize)
    r_pad = _round_up(R, rb)
    grid = (r_pad // rb,)

    # Contiguous NCHW reshapes (no transpose): row r = b*C + c, channel = r % C.
    x2 = xf.reshape(R, Lx)
    z2 = zf.reshape(R, Lz)
    if r_pad != R:
        x2 = jnp.pad(x2, ((0, r_pad - R), (0, 0)))
        z2 = jnp.pad(z2, ((0, r_pad - R), (0, 0)))

    def _row_col(per_channel):
        col = jnp.tile(per_channel, B)          # (R,)  -- tiny, per-row param
        if r_pad != R:
            col = jnp.pad(col, (0, r_pad - R))
        return col[:, None]                     # (r_pad, 1)

    sx, bx = _row_col(scale_x), _row_col(shift_x)
    sz, bz = _row_col(scale_z), _row_col(shift_z)

    data_spec = lambda lane: pl.BlockSpec((rb, lane), lambda i: (i, 0))
    col_spec = pl.BlockSpec((rb, 1), lambda i: (i, 0))

    out_x2, out_z2 = pl.pallas_call(
        _bn_pair_kernel,
        out_shape=(jax.ShapeDtypeStruct((r_pad, Lx), xf.dtype),
                   jax.ShapeDtypeStruct((r_pad, Lz), zf.dtype)),
        grid_spec=pltpu.PrefetchScalarGridSpec(
            num_scalar_prefetch=0,
            grid=grid,
            in_specs=[data_spec(Lx), data_spec(Lz),
                      col_spec, col_spec, col_spec, col_spec],
            out_specs=[data_spec(Lx), data_spec(Lz)],
        ),
        compiler_params=pltpu.CompilerParams(
            dimension_semantics=("parallel",)),
    )(x2, z2, sx, bx, sz, bz)

    out_x = out_x2[:R].reshape(B, C, Hx, Wx)
    out_z = out_z2[:R].reshape(B, C, Hz, Wz)
    return out_x, out_z


def make_params(key, num_channel):
    """Deterministic synthetic BatchNorm2d params (gamma, beta, running mean/var)."""
    ks = jax.random.split(key, 8)

    def bn(k0, k1, k2, k3):
        return {
            'gamma': 1.0 + 0.1 * jax.random.normal(k0, (num_channel,), jnp.float32),
            'beta': 0.1 * jax.random.normal(k1, (num_channel,), jnp.float32),
            'mean': 0.1 * jax.random.normal(k2, (num_channel,), jnp.float32),
            'var': 0.5 + jnp.abs(jax.random.normal(k3, (num_channel,), jnp.float32)),
        }

    return {'x': bn(*ks[:4]), 'z': bn(*ks[4:])}


def bn2d_reference(x, p, eps=1e-5):
    """Pure-JAX eval-mode BatchNorm2d reference (NCHW)."""
    scale = p['gamma'] / jnp.sqrt(p['var'] + eps)
    shift = p['beta'] - p['mean'] * scale
    return x.astype(jnp.float32) * scale[None, :, None, None] + shift[None, :, None, None]


if __name__ == "__main__":
    key = jax.random.PRNGKey(0)
    kx, kz, kp, kx2, kz2, kp2 = jax.random.split(key, 6)

    # --- small unit-test shapes (B=2, C=4, 16x16 search / 8x8 template) ------
    B, C = 2, 4
    Hx = Wx = 16
    Hz = Wz = 8

    xf = jax.random.normal(kx, (B, C, Hx, Wx), jnp.float32)
    zf = jax.random.normal(kz, (B, C, Hz, Wz), jnp.float32)
    params = make_params(kp, C)

    out_x, out_z = bn_adj_forward(xf, zf, params)
    out_x = jax.block_until_ready(out_x)
    out_z = jax.block_until_ready(out_z)

    ref_x = bn2d_reference(xf, params['x'])
    ref_z = bn2d_reference(zf, params['z'])
    assert out_x.shape == xf.shape and out_z.shape == zf.shape
    assert jnp.allclose(out_x, ref_x, atol=1e-5, rtol=1e-5)
    assert jnp.allclose(out_z, ref_z, atol=1e-5, rtol=1e-5)

    # --- production-like shape: exercises multi-step parallel grid -----------
    B2, C2 = 1, 96
    xf2 = jax.random.normal(kx2, (B2, C2, 16, 16), jnp.float32)
    zf2 = jax.random.normal(kz2, (B2, C2, 8, 8), jnp.float32)
    params2 = make_params(kp2, C2)
    ox2, oz2 = bn_adj_forward(xf2, zf2, params2)
    ox2 = jax.block_until_ready(ox2)
    oz2 = jax.block_until_ready(oz2)
    assert jnp.allclose(ox2, bn2d_reference(xf2, params2['x']), atol=1e-5, rtol=1e-5)
    assert jnp.allclose(oz2, bn2d_reference(zf2, params2['z']), atol=1e-5, rtol=1e-5)

    # --- bf16 I/O path (halves HBM bytes on a mem-bound op) ------------------
    ox3, oz3 = bn_adj_forward(xf.astype(jnp.bfloat16), zf.astype(jnp.bfloat16), params)
    ox3 = jax.block_until_ready(ox3)
    oz3 = jax.block_until_ready(oz3)
    assert ox3.dtype == jnp.bfloat16 and oz3.dtype == jnp.bfloat16
    assert jnp.allclose(ox3.astype(jnp.float32), ref_x, atol=5e-2, rtol=5e-2)
    assert jnp.allclose(oz3.astype(jnp.float32), ref_z, atol=5e-2, rtol=5e-2)

    print("KERNEL_OK")
</pallas_src>

<mosaic_0001>
module attributes {stable_mosaic.version = 11 : i64} {
  func.func @_bn_pair_kernel(%arg0: i32, %arg1: memref<8x256xf32, #tpu.memory_space<vmem>>, %arg2: memref<8x64xf32, #tpu.memory_space<vmem>>, %arg3: memref<8x1xf32, #tpu.memory_space<vmem>>, %arg4: memref<8x1xf32, #tpu.memory_space<vmem>>, %arg5: memref<8x1xf32, #tpu.memory_space<vmem>>, %arg6: memref<8x1xf32, #tpu.memory_space<vmem>>, %arg7: memref<8x256xf32, #tpu.memory_space<vmem>>, %arg8: memref<8x64xf32, #tpu.memory_space<vmem>>) attributes {dimension_semantics = [#tpu.dimension_semantics<parallel>], iteration_bounds = array<i64: 1>, scalar_prefetch = 0 : i64, scratch_operands = 0 : i64, tpu.core_type = #tpu.core_type<tc>, window_params = [{transform_indices = @transform_0, window_bounds = array<i64: 8, 256>}, {transform_indices = @transform_1, window_bounds = array<i64: 8, 64>}, {transform_indices = @transform_2, window_bounds = array<i64: 8, 1>}, {transform_indices = @transform_3, window_bounds = array<i64: 8, 1>}, {transform_indices = @transform_4, window_bounds = array<i64: 8, 1>}, {transform_indices = @transform_5, window_bounds = array<i64: 8, 1>}, {transform_indices = @transform_6, window_bounds = array<i64: 8, 256>}, {transform_indices = @transform_7, window_bounds = array<i64: 8, 64>}]} {
    %c0 = arith.constant 0 : index
    %c0_0 = arith.constant 0 : index
    %0 = vector.load %arg1[%c0, %c0_0] : memref<8x256xf32, #tpu.memory_space<vmem>>, vector<8x256xf32>
    %c0_1 = arith.constant 0 : index
    %c0_2 = arith.constant 0 : index
    %1 = vector.load %arg2[%c0_1, %c0_2] : memref<8x64xf32, #tpu.memory_space<vmem>>, vector<8x64xf32>
    %c0_3 = arith.constant 0 : index
    %c0_4 = arith.constant 0 : index
    %2 = vector.load %arg3[%c0_3, %c0_4] : memref<8x1xf32, #tpu.memory_space<vmem>>, vector<8x1xf32>
    %3 = vector.broadcast %2 : vector<8x1xf32> to vector<8x256xf32>
    %4 = arith.mulf %0, %3 : vector<8x256xf32>
    %c0_5 = arith.constant 0 : index
    %c0_6 = arith.constant 0 : index
    %5 = vector.load %arg4[%c0_5, %c0_6] : memref<8x1xf32, #tpu.memory_space<vmem>>, vector<8x1xf32>
    %6 = vector.broadcast %5 : vector<8x1xf32> to vector<8x256xf32>
    %7 = arith.addf %4, %6 : vector<8x256xf32>
    %c0_7 = arith.constant 0 : index
    %c0_8 = arith.constant 0 : index
    %8 = vector.load %arg7[%c0_7, %c0_8] : memref<8x256xf32, #tpu.memory_space<vmem>>, vector<8x256xf32>
    tpu.vector_store %arg7[%c0_7, %c0_8], %7 {strides = array<i32>} : memref<8x256xf32, #tpu.memory_space<vmem>>, vector<8x256xf32>,
    %c0_9 = arith.constant 0 : index
    %c0_10 = arith.constant 0 : index
    %9 = vector.load %arg5[%c0_9, %c0_10] : memref<8x1xf32, #tpu.memory_space<vmem>>, vector<8x1xf32>
    %10 = vector.broadcast %9 : vector<8x1xf32> to vector<8x64xf32>
    %11 = arith.mulf %1, %10 : vector<8x64xf32>
    %c0_11 = arith.constant 0 : index
    %c0_12 = arith.constant 0 : index
    %12 = vector.load %arg6[%c0_11, %c0_12] : memref<8x1xf32, #tpu.memory_space<vmem>>, vector<8x1xf32>
    %13 = vector.broadcast %12 : vector<8x1xf32> to vector<8x64xf32>
    %14 = arith.addf %11, %13 : vector<8x64xf32>
    %c0_13 = arith.constant 0 : index
    %c0_14 = arith.constant 0 : index
    %15 = vector.load %arg8[%c0_13, %c0_14] : memref<8x64xf32, #tpu.memory_space<vmem>>, vector<8x64xf32>
    tpu.vector_store %arg8[%c0_13, %c0_14], %14 {strides = array<i32>} : memref<8x64xf32, #tpu.memory_space<vmem>>, vector<8x64xf32>,
    return
  }
  func.func @transform_0(%arg0: i32) -> (i32, i32) {
    %c0_i32 = arith.constant 0 : i32
    %c0_i32_0 = arith.constant 0 : i32
    return %arg0, %c0_i32 : i32, i32
  }
  func.func @transform_1(%arg0: i32) -> (i32, i32) {
    %c0_i32 = arith.constant 0 : i32
    %c0_i32_0 = arith.constant 0 : i32
    return %arg0, %c0_i32 : i32, i32
  }
  func.func @transform_2(%arg0: i32) -> (i32, i32) {
    %c0_i32 = arith.constant 0 : i32
    %c0_i32_0 = arith.constant 0 : i32
    return %arg0, %c0_i32 : i32, i32
  }
  func.func @transform_3(%arg0: i32) -> (i32, i32) {
    %c0_i32 = arith.constant 0 : i32
    %c0_i32_0 = arith.constant 0 : i32
    return %arg0, %c0_i32 : i32, i32
  }
  func.func @transform_4(%arg0: i32) -> (i32, i32) {
    %c0_i32 = arith.constant 0 : i32
    %c0_i32_0 = arith.constant 0 : i32
    return %arg0, %c0_i32 : i32, i32
  }
  func.func @transform_5(%arg0: i32) -> (i32, i32) {
    %c0_i32 = arith.constant 0 : i32
    %c0_i32_0 = arith.constant 0 : i32
    return %arg0, %c0_i32 : i32, i32
  }
  func.func @transform_6(%arg0: i32) -> (i32, i32) {
    %c0_i32 = arith.constant 0 : i32
    %c0_i32_0 = arith.constant 0 : i32
    return %arg0, %c0_i32 : i32, i32
  }
  func.func @transform_7(%arg0: i32) -> (i32, i32) {
    %c0_i32 = arith.constant 0 : i32
    %c0_i32_0 = arith.constant 0 : i32
    return %arg0, %c0_i32 : i32, i32
  }
}

</mosaic_0001>

<llo_original>
// kernel: tpu_custom_call.1
$region0: #{tpu_custom_call.1}
  #allocation0 [shape = 'u32[]', space=smem, size = 0x4, offset = 0x4, fixed_abs, tag = 'smem constant byte address 0x4 - core index']
  #allocation1 [shape = 'u32[144,128]{1,0:T(1,128)}', space=vmem, size = 0x12000, scoped, tag = 'internal scratch']
  %s0 = inlined_call_operand.vmem [shape: f32[8,256], index: 0, kind: input, shape index: {}]
  %s1 = inlined_call_operand.vmem [shape: f32[8,64], index: 1, kind: input, shape index: {}]
  %s2 = inlined_call_operand.vmem [shape: f32[8,1], index: 2, kind: input, shape index: {}]
  %s3 = inlined_call_operand.vmem [shape: f32[8,1], index: 3, kind: input, shape index: {}]
  %s4 = inlined_call_operand.vmem [shape: f32[8,1], index: 4, kind: input, shape index: {}]
  %s5 = inlined_call_operand.vmem [shape: f32[8,1], index: 5, kind: input, shape index: {}]
  %s6 = inlined_call_operand.hbm [shape: f32[8,256], index: 6, kind: output, shape index: {0}]
  %s7 = inlined_call_operand.hbm [shape: f32[8,64], index: 7, kind: output, shape index: {1}]
  %8 = xla_tuple %s6, %s7
  %s9 = sld [smem:[#allocation0]]
  $region42: #{tpu_custom_call.1} parent=0
    _
  %s11 = ssub.s32 1, %s9
  %s12 = scalar_select 0, %s11, %s9
  $region1: #{tpu_custom_call.1} parent=0
    #allocation2 [shape = 'u8[8192]{0}', space=vmem, size = 0x2000, scoped, tag = 'output window, operand 0, single buffered']
    #allocation3 [shape = 's32[1]{0}', space=sflag, size = 0x4, scoped, tag = 'scoped memory for tpu_custom_call.1']
    #allocation4 [shape = 'u8[4096]{0}', space=vmem, size = 0x1000, scoped, tag = 'output window, operand 1, single buffered']
    #allocation5 [shape = 's32[1]{0}', space=sflag, size = 0x4, scoped, tag = 'scoped memory for tpu_custom_call.1']
    %13 = vsyncpa [#allocation3], 0
    %14 = vsyncpa [#allocation5], 0
    // Predicated region
    $region2: #{tpu_custom_call.1} parent=1 // pred_check
      _
    $region3: #{tpu_custom_call.1} parent=1 // pred_check_branch
      %16 = sbr.rel (0) target = $region5
    $region4: #{tpu_custom_call.1} parent=1 // pred_region
      _
    $region5: #{tpu_custom_call.1} parent=1 // pred_fallthru
      _
    // Predicated region
    $region6: #{tpu_custom_call.1} parent=1 // pred_check
      _
    $region7: #{tpu_custom_call.1} parent=1 // pred_check_branch
      %18 = sbr.rel (0) target = $region9
    $region8: #{tpu_custom_call.1} parent=1 // pred_region
      _
    $region9: #{tpu_custom_call.1} parent=1 // pred_fallthru
      _
    // Predicated region
    $region10: #{tpu_custom_call.1} parent=1 // pred_check
      _
    $region11: #{tpu_custom_call.1} parent=1 // pred_check_branch
      %20 = sbr.rel (0) target = $region13
    $region12: #{tpu_custom_call.1} parent=1 // pred_region
      _
    $region13: #{tpu_custom_call.1} parent=1 // pred_fallthru
      _
    // Predicated region
    $region14: #{tpu_custom_call.1} parent=1 // pred_check
      _
    $region15: #{tpu_custom_call.1} parent=1 // pred_check_branch
      %22 = sbr.rel (0) target = $region17
    $region16: #{tpu_custom_call.1} parent=1 // pred_region
      _
    $region17: #{tpu_custom_call.1} parent=1 // pred_fallthru
      _
    // Predicated region
    $region18: #{tpu_custom_call.1} parent=1 // pred_check
      _
    $region19: #{tpu_custom_call.1} parent=1 // pred_check_branch
      %24 = sbr.rel (0) target = $region21
    $region20: #{tpu_custom_call.1} parent=1 // pred_region
      _
    $region21: #{tpu_custom_call.1} parent=1 // pred_fallthru
      _
    // Predicated region
    $region22: #{tpu_custom_call.1} parent=1 // pred_check
      _
    $region23: #{tpu_custom_call.1} parent=1 // pred_check_branch
      %26 = sbr.rel (0) target = $region25
    $region24: #{tpu_custom_call.1} parent=1 // pred_region
      _
    $region25: #{tpu_custom_call.1} parent=1 // pred_fallthru
      _
    %v27 = vld [vmem:[%s0] sm:$0xff]
    %v28 = vld [vmem:[%s0 + $0x8] sm:$0xff]
    %v29 = vld [vmem:[%s1] sm:$0xff]
    %v30 = vld [vmem:[%s2] sm:$0xff]
    %32 = vset.pattern.permute.xlu0 0
    %33 = vperm.xlu0 %32, %v30
    %v34 = vpop.permute.xlu0 %33
    %v36 = vmul.f32 %v27, %v34
    %v37 = vmul.f32 %v28, %v34
    %v38 = vld [vmem:[%s3] sm:$0xff]
    %40 = vset.pattern.permute.xlu0 0
    %41 = vperm.xlu0 %40, %v38
    %v42 = vpop.permute.xlu0 %41
    %v44 = vadd.f32 %v36, %v42
    %v45 = vadd.f32 %v37, %v42
    %46 = vst [vmem:[#allocation2] sm:$0xff] %v44
    %47 = vst [vmem:[#allocation2 + $0x8] sm:$0xff] %v45
    %v48 = vld [vmem:[%s4] sm:$0xff]
    %50 = vset.pattern.permute.xlu0 0
    %51 = vperm.xlu0 %50, %v48
    %v52 = vpop.permute.xlu0 %51
    %v54 = vmul.f32 %v29, %v52
    %v55 = vld [vmem:[%s5] sm:$0xff]
    %57 = vset.pattern.permute.xlu0 0
    %58 = vperm.xlu0 %57, %v55
    %v59 = vpop.permute.xlu0 %58
    %v61 = vadd.f32 %v54, %v59
    %vm62 = vcmask 523264
    %63 = vst.msk [vmem:[#allocation4] sm:$0xff] %vm62, %v61
    // Predicated region
    $region26: #{tpu_custom_call.1} parent=1 // pred_check
      _
    $region27: #{tpu_custom_call.1} parent=1 // pred_check_branch
      %65 = sbr.rel (0) target = $region29
    $region28: #{tpu_custom_call.1} parent=1 // pred_region
      %s67 = ssub.s32 256, 256
      %68 = vsyncadd [#allocation3], %s67
      %s70 = sshll.u32 [#allocation2], 4
      %s71 = int_to_ptr.vmem [resolvable:$true] %s70
      %73 = dma.vmem_to_hbm [thread:$0]  %s71, 256, %s6, [#allocation3]
    $region29: #{tpu_custom_call.1} parent=1 // pred_fallthru
      _
    // Predicated region
    $region30: #{tpu_custom_call.1} parent=1 // pred_check
      _
    $region31: #{tpu_custom_call.1} parent=1 // pred_check_branch
      %75 = sbr.rel (0) target = $region33
    $region32: #{tpu_custom_call.1} parent=1 // pred_region
      %s77 = ssub.s32 128, 128
      %78 = vsyncadd [#allocation5], %s77
      %s80 = sshll.u32 [#allocation4], 4
      %s81 = int_to_ptr.vmem [resolvable:$true] %s80
      %83 = dma.vmem_to_hbm [thread:$0]  %s81, 128, %s7, [#allocation5]
    $region33: #{tpu_custom_call.1} parent=1 // pred_fallthru
      _
    // Predicated region
    $region34: #{tpu_custom_call.1} parent=1 // pred_check
      _
    $region35: #{tpu_custom_call.1} parent=1 // pred_check_branch
      %85 = sbr.rel (0) target = $region37
    $region36: #{tpu_custom_call.1} parent=1 // pred_region
      %86 = dma.done [#allocation3], 256
    $region37: #{tpu_custom_call.1} parent=1 // pred_fallthru
      _
    // Predicated region
    $region38: #{tpu_custom_call.1} parent=1 // pred_check
      _
    $region39: #{tpu_custom_call.1} parent=1 // pred_check_branch
      %88 = sbr.rel (0) target = $region41
    $region40: #{tpu_custom_call.1} parent=1 // pred_region
      %89 = dma.done [#allocation5], 128
    $region41: #{tpu_custom_call.1} parent=1 // pred_fallthru
      _
    %90 = vsyncpa [#allocation3], 1
    %91 = vsyncpa [#allocation5], 1

</llo_original>
